<compile_context>
chip_gen: v7x
topology: tpu7x:2x2x1
jax: 0.10.0
libtpu: 0.0.40
codegen_flags: <defaults>
</compile_context>

<pallas_src>
import math
import functools

import jax
import jax.numpy as jnp
from jax.experimental import pallas as pl
from jax.experimental.pallas import tpu as pltpu


# ----------------------------------------------------------------------------
# Fused decoder kernel:
#   scale by sqrt(d_model) + positional encoding + LayerNorm (torch-style:
#   unbiased std, eps added to std) + linear (D -> V, V tiled) + log_softmax
# Grid: (row_tiles, vocab_tiles); vocab innermost ("arbitrary").
# ----------------------------------------------------------------------------
def decode_predict_kernel(x_ref, pe_ref, w_ref, b_ref, o_ref,
                          xn_ref, m_ref, l_ref,
                          *, d_model, alpha, beta, eps, tv):
    v = pl.program_id(1)
    nv = pl.num_programs(1)

    @pl.when(v == 0)
    def _():
        # Embedding scale + positional encoding + LayerNormalization.
        # torch.Tensor.std is the *unbiased* estimator (divide by D-1) and the
        # reference adds eps to std (not variance) — kept for fidelity.
        x = x_ref[...] * jnp.float32(math.sqrt(d_model)) + pe_ref[...]
        mean = jnp.mean(x, axis=-1, keepdims=True)
        cen = x - mean
        var = jnp.sum(cen * cen, axis=-1, keepdims=True) * jnp.float32(
            1.0 / (d_model - 1))
        std = jnp.sqrt(var)
        inv = pl.reciprocal(std + jnp.float32(eps), approx=True)
        y = jnp.float32(alpha) * (cen * inv) + jnp.float32(beta)
        xn_ref[...] = y.astype(xn_ref.dtype)          # bf16 for the MXU
        m_ref[...] = jnp.full(m_ref.shape, -jnp.inf, jnp.float32)
        l_ref[...] = jnp.zeros(l_ref.shape, jnp.float32)

    # Logits tile on the MXU: bf16 x bf16 -> f32 accumulation.
    logits = jnp.dot(xn_ref[...], w_ref[...],
                     preferred_element_type=jnp.float32) + b_ref[...]

    # Online logsumexp across vocab tiles.
    m_prev = m_ref[...]
    m_new = jnp.maximum(m_prev, jnp.max(logits, axis=-1, keepdims=True))
    l_ref[...] = (l_ref[...] * jnp.exp(m_prev - m_new)
                  + jnp.sum(jnp.exp(logits - m_new), axis=-1, keepdims=True))
    m_ref[...] = m_new

    # Stage raw logits into the row-resident output block at this vocab tile.
    col = pl.multiple_of(v * tv, tv)
    o_ref[:, pl.ds(col, tv)] = logits

    @pl.when(v == nv - 1)
    def _():
        lse = m_ref[...] + jnp.log(l_ref[...])
        o_ref[...] = o_ref[...] - lse            # log_softmax = logits - lse


def _pick_row_tile(rows):
    for t in (256, 128, 64, 32, 16, 8):
        if rows % t == 0:
            return t
    return rows  # fallback: single full block (block == array dim is legal)


def _pick_vocab_tile(vocab):
    for t in (1024, 512, 256, 128):
        if vocab % t == 0:
            return t
    return vocab


def decode_and_predict(dec_emb, pe, w_t, bias, *,
                       alpha=1.0, beta=0.0, eps=1e-6):
    """dec_emb: (B,S,D) gathered embeddings; pe: (S,D); w_t: (D,V); bias: (V,)."""
    B, S, D = dec_emb.shape
    V = w_t.shape[1]
    R = B * S
    tr = _pick_row_tile(R)
    tv = _pick_vocab_tile(V)

    x = dec_emb.reshape(R, D).astype(jnp.float32)
    pe_rows = jnp.tile(pe.astype(jnp.float32), (B, 1))       # (R, D)
    w_bf16 = w_t.astype(jnp.bfloat16)                         # (D, V) bf16 weights
    bias2d = bias.reshape(1, V).astype(jnp.float32)

    kernel = functools.partial(decode_predict_kernel, d_model=D,
                               alpha=alpha, beta=beta, eps=eps, tv=tv)

    out = pl.pallas_call(
        kernel,
        out_shape=jax.ShapeDtypeStruct((R, V), jnp.float32),
        grid_spec=pltpu.PrefetchScalarGridSpec(
            num_scalar_prefetch=0,
            grid=(R // tr, V // tv),
            in_specs=[
                pl.BlockSpec((tr, D), lambda i, v: (i, 0)),   # embeddings rows
                pl.BlockSpec((tr, D), lambda i, v: (i, 0)),   # positional enc
                pl.BlockSpec((D, tv), lambda i, v: (0, v)),   # weight V-tile
                pl.BlockSpec((1, tv), lambda i, v: (0, v)),   # bias V-tile
            ],
            # Full-width output block, resident across the vocab axis; written
            # column-tile by column-tile, normalized once on the last V tile.
            out_specs=pl.BlockSpec((tr, V), lambda i, v: (i, 0)),
            scratch_shapes=[
                pltpu.VMEM((tr, D), jnp.bfloat16),   # normalized x (MXU LHS)
                pltpu.VMEM((tr, 1), jnp.float32),    # running max
                pltpu.VMEM((tr, 1), jnp.float32),    # running sum-exp
            ],
        ),
        compiler_params=pltpu.CompilerParams(
            dimension_semantics=("parallel", "arbitrary"),
            vmem_limit_bytes=64 * 1024 * 1024,
        ),
    )(x, pe_rows, w_bf16, bias2d)
    return out.reshape(B, S, V)


# ----------------------------------------------------------------------------
# Plain-JAX glue (parameter setup, embedding gather, mask creation)
# ----------------------------------------------------------------------------
def make_positional_encoding(context_size, d_model):
    pe = jnp.zeros((context_size, d_model), jnp.float32)
    position = jnp.arange(context_size, dtype=jnp.float32)[:, None]
    denom = jnp.exp(
        jnp.arange(0, d_model, 2, dtype=jnp.float32)
        * (-math.log(10000.0) / d_model))
    pe = pe.at[:, 0::2].set(jnp.sin(position * denom))
    pe = pe.at[:, 1::2].set(jnp.cos(position * denom))
    return pe


def create_mask(x):
    # torch.triu(ones(B, S, S), diagonal=1).int()
    B, S = x.shape
    tri = jnp.triu(jnp.ones((S, S), jnp.int32), k=1)
    return jnp.broadcast_to(tri, (B, S, S))


@jax.jit
def transformer_forward(params, enc_input, dec_input):
    # Masks are created exactly as in the reference; with empty encoder/decoder
    # layer stacks they are never consumed, so jit DCEs them.
    _input_mask = create_mask(enc_input)
    _output_mask = create_mask(dec_input)

    # Encoder path: with an empty encoder layer list its output is consumed only
    # by the (absent) decoder layers, so it is dead work — dropped explicitly
    # (jit would DCE it anyway). Dropout (p=0.1) is eval-mode identity.
    # TODO(synk): per-layer encoder/decoder blocks (attention + FFN) are not
    # defined in the reference source; Encoder/Decoder reduce to their final
    # LayerNormalization.

    # decode() + predict(), fused into a single Pallas call:
    #   InputEmbedding (gather, JAX) -> [kernel] scale + PE + LayerNorm ->
    #   Linear (D->V) -> log_softmax.
    dec_emb = jnp.take(params["out_embed"], dec_input, axis=0)   # (B, S, D)
    return decode_and_predict(dec_emb, params["pe"],
                              params["pred_w_t"], params["pred_b"])


if __name__ == "__main__":
    # Small but TPU-friendly shapes: D and V multiples of 128 (lane axis),
    # B*S = 16 rows (multiple of 8 sublanes).
    B, S, D, V = 2, 8, 128, 256

    key = jax.random.PRNGKey(0)
    k1, k2, k3, k4, k5, k6 = jax.random.split(key, 6)

    params = {
        "in_embed": jax.random.normal(k1, (V, D), jnp.float32),
        "out_embed": jax.random.normal(k2, (V, D), jnp.float32),
        # nn.Linear(d_model, vocab_size): weight (V, D), bias (V,); pass W^T.
        "pred_w_t": (jax.random.normal(k3, (V, D), jnp.float32) * 0.1).T,
        "pred_b": jax.random.normal(k4, (V,), jnp.float32) * 0.1,
        "pe": make_positional_encoding(S, D),
    }

    enc_input = jax.random.randint(k5, (B, S), 0, V, dtype=jnp.int32)
    dec_input = jax.random.randint(k6, (B, S), 0, V, dtype=jnp.int32)

    out = transformer_forward(params, enc_input, dec_input)
    out = jax.block_until_ready(out)

    assert out.shape == (B, S, V), out.shape
    # log_softmax rows must sum (in prob space) to ~1
    row_sums = jnp.exp(out).sum(-1)
    assert bool(jnp.all(jnp.abs(row_sums - 1.0) < 1e-3)), row_sums

    print("KERNEL_OK")
</pallas_src>

<mosaic_0001>
module attributes {stable_mosaic.version = 11 : i64} {
  func.func @decode_predict_kernel(%arg0: i32, %arg1: i32, %arg2: memref<16x128xf32, #tpu.memory_space<vmem>>, %arg3: memref<16x128xf32, #tpu.memory_space<vmem>>, %arg4: memref<128x256xbf16, #tpu.memory_space<vmem>>, %arg5: memref<1x256xf32, #tpu.memory_space<vmem>>, %arg6: memref<16x256xf32, #tpu.memory_space<vmem>>, %arg7: memref<16x128xbf16, #tpu.memory_space<vmem>>, %arg8: memref<16x1xf32, #tpu.memory_space<vmem>>, %arg9: memref<16x1xf32, #tpu.memory_space<vmem>>) attributes {dimension_semantics = [#tpu.dimension_semantics<parallel>, #tpu.dimension_semantics<arbitrary>], iteration_bounds = array<i64: 1, 1>, scalar_prefetch = 0 : i64, scratch_operands = 3 : i64, tpu.core_type = #tpu.core_type<tc>, window_params = [{transform_indices = @transform_0, window_bounds = array<i64: 16, 128>}, {transform_indices = @transform_1, window_bounds = array<i64: 16, 128>}, {transform_indices = @transform_2, window_bounds = array<i64: 128, 256>}, {transform_indices = @transform_3, window_bounds = array<i64: 1, 256>}, {transform_indices = @transform_4, window_bounds = array<i64: 16, 256>}]} {
    %c0_i32 = arith.constant 0 : i32
    %0 = arith.cmpi eq, %arg1, %c0_i32 : i32
    %1 = arith.extui %0 : i1 to i32
    %c0_i32_0 = arith.constant 0 : i32
    %2 = arith.cmpi ne, %1, %c0_i32_0 : i32
    scf.if %2 {
      %c0_19 = arith.constant 0 : index
      %c0_20 = arith.constant 0 : index
      %32 = vector.load %arg2[%c0_19, %c0_20] : memref<16x128xf32, #tpu.memory_space<vmem>>, vector<16x128xf32>
      %cst_21 = arith.constant 11.3137083 : f32
      %33 = vector.broadcast %cst_21 : f32 to vector<16x128xf32>
      %34 = arith.mulf %32, %33 : vector<16x128xf32>
      %c0_22 = arith.constant 0 : index
      %c0_23 = arith.constant 0 : index
      %35 = vector.load %arg3[%c0_22, %c0_23] : memref<16x128xf32, #tpu.memory_space<vmem>>, vector<16x128xf32>
      %36 = arith.addf %34, %35 : vector<16x128xf32>
      %cst_24 = arith.constant dense<0.000000e+00> : vector<16xf32>
      %37 = vector.multi_reduction <add>, %36, %cst_24 [1] : vector<16x128xf32> to vector<16xf32>
      %38 = vector.shape_cast %37 : vector<16xf32> to vector<16x1xf32>
      %cst_25 = arith.constant 1.280000e+02 : f32
      %39 = vector.broadcast %cst_25 : f32 to vector<16x1xf32>
      %40 = arith.divf %38, %39 : vector<16x1xf32>
      %41 = vector.broadcast %40 : vector<16x1xf32> to vector<16x128xf32>
      %42 = arith.subf %36, %41 : vector<16x128xf32>
      %43 = arith.mulf %42, %42 : vector<16x128xf32>
      %cst_26 = arith.constant dense<0.000000e+00> : vector<16xf32>
      %44 = vector.multi_reduction <add>, %43, %cst_26 [1] : vector<16x128xf32> to vector<16xf32>
      %45 = vector.shape_cast %44 : vector<16xf32> to vector<16x1xf32>
      %cst_27 = arith.constant 0.00787401571 : f32
      %46 = vector.broadcast %cst_27 : f32 to vector<16x1xf32>
      %47 = arith.mulf %45, %46 : vector<16x1xf32>
      %48 = math.sqrt %47 : vector<16x1xf32>
      %cst_28 = arith.constant 9.99999997E-7 : f32
      %49 = vector.broadcast %cst_28 : f32 to vector<16x1xf32>
      %50 = arith.addf %48, %49 : vector<16x1xf32>
      %51 = tpu.reciprocal %50 {approx = true} : vector<16x1xf32> -> vector<16x1xf32>
      %52 = vector.broadcast %51 : vector<16x1xf32> to vector<16x128xf32>
      %53 = arith.mulf %42, %52 : vector<16x128xf32>
      %cst_29 = arith.constant 1.000000e+00 : f32
      %54 = vector.broadcast %cst_29 : f32 to vector<16x128xf32>
      %55 = arith.mulf %54, %53 : vector<16x128xf32>
      %cst_30 = arith.constant 0.000000e+00 : f32
      %56 = vector.broadcast %cst_30 : f32 to vector<16x128xf32>
      %57 = arith.addf %55, %56 : vector<16x128xf32>
      %58 = arith.truncf %57 : vector<16x128xf32> to vector<16x128xbf16>
      %c0_31 = arith.constant 0 : index
      %c0_32 = arith.constant 0 : index
      %59 = vector.load %arg7[%c0_31, %c0_32] : memref<16x128xbf16, #tpu.memory_space<vmem>>, vector<16x128xbf16>
      tpu.vector_store %arg7[%c0_31, %c0_32], %58 {strides = array<i32>} : memref<16x128xbf16, #tpu.memory_space<vmem>>, vector<16x128xbf16>,
      %cst_33 = arith.constant 0xFF800000 : f32
      %60 = vector.broadcast %cst_33 : f32 to vector<16x1xf32>
      %c0_34 = arith.constant 0 : index
      %c0_35 = arith.constant 0 : index
      %61 = vector.load %arg8[%c0_34, %c0_35] : memref<16x1xf32, #tpu.memory_space<vmem>>, vector<16x1xf32>
      tpu.vector_store %arg8[%c0_34, %c0_35], %60 {strides = array<i32>} : memref<16x1xf32, #tpu.memory_space<vmem>>, vector<16x1xf32>,
      %cst_36 = arith.constant 0.000000e+00 : f32
      %62 = vector.broadcast %cst_36 : f32 to vector<16x1xf32>
      %c0_37 = arith.constant 0 : index
      %c0_38 = arith.constant 0 : index
      %63 = vector.load %arg9[%c0_37, %c0_38] : memref<16x1xf32, #tpu.memory_space<vmem>>, vector<16x1xf32>
      tpu.vector_store %arg9[%c0_37, %c0_38], %62 {strides = array<i32>} : memref<16x1xf32, #tpu.memory_space<vmem>>, vector<16x1xf32>,
    } else {
    }
    %c0 = arith.constant 0 : index
    %c0_1 = arith.constant 0 : index
    %3 = vector.load %arg7[%c0, %c0_1] : memref<16x128xbf16, #tpu.memory_space<vmem>>, vector<16x128xbf16>
    %c0_2 = arith.constant 0 : index
    %c0_3 = arith.constant 0 : index
    %4 = vector.load %arg4[%c0_2, %c0_3] : memref<128x256xbf16, #tpu.memory_space<vmem>>, vector<128x256xbf16>
    %cst = arith.constant dense<0.000000e+00> : vector<16x256xf32>
    %5 = tpu.matmul %3, %4, %cst {dimension_numbers = #tpu.dot_dimension_numbers<[1], [0], [0], [1], [0, 0, 1, 1], [], []>} : vector<16x128xbf16>, vector<128x256xbf16>, vector<16x256xf32> -> vector<16x256xf32>
    %c0_4 = arith.constant 0 : index
    %c0_5 = arith.constant 0 : index
    %6 = vector.load %arg5[%c0_4, %c0_5] : memref<1x256xf32, #tpu.memory_space<vmem>>, vector<1x256xf32>
    %7 = vector.broadcast %6 : vector<1x256xf32> to vector<16x256xf32>
    %8 = arith.addf %5, %7 : vector<16x256xf32>
    %c0_6 = arith.constant 0 : index
    %c0_7 = arith.constant 0 : index
    %9 = vector.load %arg8[%c0_6, %c0_7] : memref<16x1xf32, #tpu.memory_space<vmem>>, vector<16x1xf32>
    %cst_8 = arith.constant dense<0xFF800000> : vector<16xf32>
    %10 = vector.multi_reduction <maximumf>, %8, %cst_8 [1] : vector<16x256xf32> to vector<16xf32>
    %11 = vector.shape_cast %10 : vector<16xf32> to vector<16x1xf32>
    %12 = arith.maximumf %9, %11 : vector<16x1xf32>
    %c0_9 = arith.constant 0 : index
    %c0_10 = arith.constant 0 : index
    %13 = vector.load %arg9[%c0_9, %c0_10] : memref<16x1xf32, #tpu.memory_space<vmem>>, vector<16x1xf32>
    %14 = arith.subf %9, %12 : vector<16x1xf32>
    %15 = math.exp %14 : vector<16x1xf32>
    %16 = arith.mulf %13, %15 : vector<16x1xf32>
    %17 = vector.broadcast %12 : vector<16x1xf32> to vector<16x256xf32>
    %18 = arith.subf %8, %17 : vector<16x256xf32>
    %19 = math.exp %18 : vector<16x256xf32>
    %cst_11 = arith.constant dense<0.000000e+00> : vector<16xf32>
    %20 = vector.multi_reduction <add>, %19, %cst_11 [1] : vector<16x256xf32> to vector<16xf32>
    %21 = vector.shape_cast %20 : vector<16xf32> to vector<16x1xf32>
    %22 = arith.addf %16, %21 : vector<16x1xf32>
    %c0_12 = arith.constant 0 : index
    %c0_13 = arith.constant 0 : index
    %23 = vector.load %arg9[%c0_12, %c0_13] : memref<16x1xf32, #tpu.memory_space<vmem>>, vector<16x1xf32>
    tpu.vector_store %arg9[%c0_12, %c0_13], %22 {strides = array<i32>} : memref<16x1xf32, #tpu.memory_space<vmem>>, vector<16x1xf32>,
    %c0_14 = arith.constant 0 : index
    %c0_15 = arith.constant 0 : index
    %24 = vector.load %arg8[%c0_14, %c0_15] : memref<16x1xf32, #tpu.memory_space<vmem>>, vector<16x1xf32>
    tpu.vector_store %arg8[%c0_14, %c0_15], %12 {strides = array<i32>} : memref<16x1xf32, #tpu.memory_space<vmem>>, vector<16x1xf32>,
    %c256_i32 = arith.constant 256 : i32
    %25 = arith.muli %arg1, %c256_i32 : i32
    %26 = tpu.assume_multiple %25, 256 : i32
    %c0_16 = arith.constant 0 : index
    %27 = arith.index_cast %26 : i32 to index
    %28 = vector.load %arg6[%c0_16, %27] : memref<16x256xf32, #tpu.memory_space<vmem>>, vector<16x256xf32>
    tpu.vector_store %arg6[%c0_16, %27], %8 {strides = array<i32>} : memref<16x256xf32, #tpu.memory_space<vmem>>, vector<16x256xf32>,
    %c0_i32_17 = arith.constant 0 : i32
    %29 = arith.cmpi eq, %arg1, %c0_i32_17 : i32
    %30 = arith.extui %29 : i1 to i32
    %c0_i32_18 = arith.constant 0 : i32
    %31 = arith.cmpi ne, %30, %c0_i32_18 : i32
    scf.if %31 {
      %c0_19 = arith.constant 0 : index
      %c0_20 = arith.constant 0 : index
      %32 = vector.load %arg8[%c0_19, %c0_20] : memref<16x1xf32, #tpu.memory_space<vmem>>, vector<16x1xf32>
      %c0_21 = arith.constant 0 : index
      %c0_22 = arith.constant 0 : index
      %33 = vector.load %arg9[%c0_21, %c0_22] : memref<16x1xf32, #tpu.memory_space<vmem>>, vector<16x1xf32>
      %34 = math.log %33 : vector<16x1xf32>
      %35 = arith.addf %32, %34 : vector<16x1xf32>
      %c0_23 = arith.constant 0 : index
      %c0_24 = arith.constant 0 : index
      %36 = vector.load %arg6[%c0_23, %c0_24] : memref<16x256xf32, #tpu.memory_space<vmem>>, vector<16x256xf32>
      %37 = vector.broadcast %35 : vector<16x1xf32> to vector<16x256xf32>
      %38 = arith.subf %36, %37 : vector<16x256xf32>
      %c0_25 = arith.constant 0 : index
      %c0_26 = arith.constant 0 : index
      %39 = vector.load %arg6[%c0_25, %c0_26] : memref<16x256xf32, #tpu.memory_space<vmem>>, vector<16x256xf32>
      tpu.vector_store %arg6[%c0_25, %c0_26], %38 {strides = array<i32>} : memref<16x256xf32, #tpu.memory_space<vmem>>, vector<16x256xf32>,
    } else {
    }
    return
  }
  func.func @transform_0(%arg0: i32, %arg1: i32) -> (i32, i32) {
    %c0_i32 = arith.constant 0 : i32
    %c0_i32_0 = arith.constant 0 : i32
    return %arg0, %c0_i32 : i32, i32
  }
  func.func @transform_1(%arg0: i32, %arg1: i32) -> (i32, i32) {
    %c0_i32 = arith.constant 0 : i32
    %c0_i32_0 = arith.constant 0 : i32
    return %arg0, %c0_i32 : i32, i32
  }
  func.func @transform_2(%arg0: i32, %arg1: i32) -> (i32, i32) {
    %c0_i32 = arith.constant 0 : i32
    %c0_i32_0 = arith.constant 0 : i32
    return %c0_i32, %arg1 : i32, i32
  }
  func.func @transform_3(%arg0: i32, %arg1: i32) -> (i32, i32) {
    %c0_i32 = arith.constant 0 : i32
    %c0_i32_0 = arith.constant 0 : i32
    return %c0_i32, %arg1 : i32, i32
  }
  func.func @transform_4(%arg0: i32, %arg1: i32) -> (i32, i32) {
    %c0_i32 = arith.constant 0 : i32
    %c0_i32_0 = arith.constant 0 : i32
    return %arg0, %c0_i32 : i32, i32
  }
}

</mosaic_0001>

<llo_original>
// kernel: transformer_forward.1
$region0: #{transformer_forward.1}
  #allocation0 [shape = 'u32[]', space=smem, size = 0x4, offset = 0x4, fixed_abs, tag = 'smem constant byte address 0x4 - core index']
  #allocation1 [shape = 'u32[144,128]{1,0:T(1,128)}', space=vmem, size = 0x12000, scoped, tag = 'internal scratch']
  #allocation2 [shape = 'bf16[16,128]{1,0:T(16,128)(2,1)}', space=vmem, size = 0x1000, scoped, tag = 'scratch operand']
  #allocation3 [shape = 'f32[16,1]{1,0:T(8,128)}', space=vmem, size = 0x2000, scoped, tag = 'scratch operand']
  #allocation4 [shape = 'f32[16,1]{1,0:T(8,128)}', space=vmem, size = 0x2000, scoped, tag = 'scratch operand']
  %s0 = inlined_call_operand.hbm [shape: f32[16,128], index: 0, kind: input, shape index: {}]
  %s1 = inlined_call_operand.hbm [shape: f32[16,128], index: 1, kind: input, shape index: {}]
  %s2 = inlined_call_operand.hbm [shape: bf16[128,256], index: 2, kind: input, shape index: {}]
  %s3 = inlined_call_operand.hbm [shape: f32[1,256], index: 3, kind: input, shape index: {}]
  %s4 = inlined_call_operand.hbm [shape: f32[16,256], index: 4, kind: output, shape index: {}]
  %s5 = sld [smem:[#allocation0]]
  $region50: #{transformer_forward.1} parent=0
    _
  %s7 = ssub.s32 1, %s5
  %s8 = scalar_select 0, %s7, %s5
  $region1: #{transformer_forward.1} parent=0
    #allocation5 [shape = 'u8[8192]{0}', space=vmem, size = 0x2000, scoped, tag = 'input window, operand 0, single buffered']
    #allocation6 [shape = 's32[1]{0}', space=sflag, size = 0x4, scoped, tag = 'scoped memory for transformer_forward.1']
    #allocation7 [shape = 's32[1]{0}', space=sflag, size = 0x4, scoped, tag = 'scoped memory for transformer_forward.1']
    #allocation8 [shape = 'u8[8192]{0}', space=vmem, size = 0x2000, scoped, tag = 'input window, operand 1, single buffered']
    #allocation9 [shape = 's32[1]{0}', space=sflag, size = 0x4, scoped, tag = 'scoped memory for transformer_forward.1']
    #allocation10 [shape = 'u8[65536]{0}', space=vmem, size = 0x10000, scoped, tag = 'input window, operand 2, single buffered']
    #allocation11 [shape = 'u8[1024]{0}', space=vmem, size = 0x400, scoped, tag = 'input window, operand 3, single buffered']
    #allocation12 [shape = 's32[1]{0}', space=sflag, size = 0x4, scoped, tag = 'scoped memory for transformer_forward.1']
    #allocation13 [shape = 'u8[16384]{0}', space=vmem, size = 0x4000, scoped, tag = 'output window, operand 0, single buffered']
    %9 = vsyncpa [#allocation6], 0
    %10 = vsyncpa [#allocation9], 0
    %11 = vsyncpa [#allocation12], 0
    %12 = vsyncpa [#allocation7], 0
    // Predicated region
    $region2: #{transformer_forward.1} parent=1 // pred_check
      _
    $region3: #{transformer_forward.1} parent=1 // pred_check_branch
      %14 = sbr.rel (0) target = $region5
    $region4: #{transformer_forward.1} parent=1 // pred_region
      %s16 = ssub.s32 256, 256
      %17 = vsyncadd [#allocation6], %s16
      %s18 = sshll.u32 [#allocation5], 4
      %s19 = int_to_ptr.vmem [resolvable:$true] %s18
      %24 = dma.hbm_to_vmem [thread:$0]  %s0, 256, %s19, [#allocation6], 128, 128, 8
    $region5: #{transformer_forward.1} parent=1 // pred_fallthru
      _
    // Predicated region
    $region6: #{transformer_forward.1} parent=1 // pred_check
      _
    $region7: #{transformer_forward.1} parent=1 // pred_check_branch
      %26 = sbr.rel (0) target = $region9
    $region8: #{transformer_forward.1} parent=1 // pred_region
      %s28 = ssub.s32 256, 256
      %29 = vsyncadd [#allocation9], %s28
      %s30 = sshll.u32 [#allocation8], 4
      %s31 = int_to_ptr.vmem [resolvable:$true] %s30
      %36 = dma.hbm_to_vmem [thread:$0]  %s1, 256, %s31, [#allocation9], 128, 128, 8
    $region9: #{transformer_forward.1} parent=1 // pred_fallthru
      _
    // Predicated region
    $region10: #{transformer_forward.1} parent=1 // pred_check
      _
    $region11: #{transformer_forward.1} parent=1 // pred_check_branch
      %38 = sbr.rel (0) target = $region13
    $region12: #{transformer_forward.1} parent=1 // pred_region
      %s40 = ssub.s32 2048, 2048
      %41 = vsyncadd [#allocation9], %s40
      %s42 = sshll.u32 [#allocation10], 4
      %s43 = int_to_ptr.vmem [resolvable:$true] %s42
      %48 = dma.hbm_to_vmem [thread:$0]  %s2, 2048, %s43, [#allocation9], 128, 128, 8
    $region13: #{transformer_forward.1} parent=1 // pred_fallthru
      _
    // Predicated region
    $region14: #{transformer_forward.1} parent=1 // pred_check
      _
    $region15: #{transformer_forward.1} parent=1 // pred_check_branch
      %50 = sbr.rel (0) target = $region17
    $region16: #{transformer_forward.1} parent=1 // pred_region
      %s52 = ssub.s32 32, 32
      %53 = vsyncadd [#allocation12], %s52
      %s55 = sshll.u32 [#allocation11], 4
      %s56 = int_to_ptr.vmem [resolvable:$true] %s55
      %58 = dma.hbm_to_vmem [thread:$0]  %s3, 32, %s56, [#allocation12]
    $region17: #{transformer_forward.1} parent=1 // pred_fallthru
      _
    // Predicated region
    $region18: #{transformer_forward.1} parent=1 // pred_check
      _
    $region19: #{transformer_forward.1} parent=1 // pred_check_branch
      %60 = sbr.rel (0) target = $region21
    $region20: #{transformer_forward.1} parent=1 // pred_region
      %61 = dma.done [#allocation6], 256
    $region21: #{transformer_forward.1} parent=1 // pred_fallthru
      _
    // Predicated region
    $region22: #{transformer_forward.1} parent=1 // pred_check
      _
    $region23: #{transformer_forward.1} parent=1 // pred_check_branch
      %63 = sbr.rel (0) target = $region25
    $region24: #{transformer_forward.1} parent=1 // pred_region
      %64 = dma.done [#allocation9], 256
    $region25: #{transformer_forward.1} parent=1 // pred_fallthru
      _
    // Predicated region
    $region26: #{transformer_forward.1} parent=1 // pred_check
      _
    $region27: #{transformer_forward.1} parent=1 // pred_check_branch
      %66 = sbr.rel (0) target = $region29
    $region28: #{transformer_forward.1} parent=1 // pred_region
      %67 = dma.done [#allocation9], 2048
    $region29: #{transformer_forward.1} parent=1 // pred_fallthru
      _
    // Predicated region
    $region30: #{transformer_forward.1} parent=1 // pred_check
      _
    $region31: #{transformer_forward.1} parent=1 // pred_check_branch
      %69 = sbr.rel (0) target = $region33
    $region32: #{transformer_forward.1} parent=1 // pred_region
      %70 = dma.done [#allocation12], 32
    $region33: #{transformer_forward.1} parent=1 // pred_fallthru
      _
    %p72 = scmp.eq.s32.totalorder 0, 0
    // Predicated region
    $region34: #{transformer_forward.1} parent=1 // pred_check
      %p73 = pneg %p72
    $region35: #{transformer_forward.1} parent=1 // pred_check_branch
      %75 = sbr.rel (%p73) target = $region37
    $region36: #{transformer_forward.1} parent=1 // pred_region
      %v76 = vld [vmem:[#allocation5] sm:$0xff]
      %v77 = vld [vmem:[#allocation5 + $0x8] sm:$0xff]
      %v78 = vmul.f32 %v76, 11.313708
      %v79 = vmul.f32 %v77, 11.313708
      %v80 = vld [vmem:[#allocation8] sm:$0xff]
      %v81 = vld [vmem:[#allocation8 + $0x8] sm:$0xff]
      %v82 = vadd.f32 %v78, %v80
      %v83 = vadd.f32 %v79, %v81
      %84 = vadd.xlane.f32.xlu0 %v82
      %v85 = vpop.xlane.xlu0 %84
      %86 = vadd.xlane.f32.xlu0 %v83
      %v87 = vpop.xlane.xlu0 %86
      %v88 = vrcp.pop 128.0
      %v89 = vmul.f32 %v85, %v88
      %v90 = vmul.f32 %v87, %v88
      %v91 = vsub.f32 %v82, %v89
      %v92 = vsub.f32 %v83, %v90
      %v93 = vmul.f32 %v91, %v91
      %v94 = vmul.f32 %v92, %v92
      %95 = vadd.xlane.f32.xlu0 %v93
      %v96 = vpop.xlane.xlu0 %95
      %97 = vadd.xlane.f32.xlu0 %v94
      %v98 = vpop.xlane.xlu0 %97
      %v99 = vmul.f32 %v96, 0.007874016
      %v100 = vmul.f32 %v98, 0.007874016
      %v101 = vrsqrt.pop %v99
      %v102 = vmul.f32 %v99, %v101
      %vm103 = vcmp.eq.f32.partialorder %v99, inf
      %v104 = vsel %vm103, %v99, %v102
      %vm105 = vcmp.eq.f32.partialorder %v99, 0.0
      %v106 = vand.u32 %v99, 2147483648
      %v107 = vsel %vm105, %v106, %v104
      %v108 = vrsqrt.pop %v100
      %v109 = vmul.f32 %v100, %v108
      %vm110 = vcmp.eq.f32.partialorder %v100, inf
      %v111 = vsel %vm110, %v100, %v109
      %vm112 = vcmp.eq.f32.partialorder %v100, 0.0
      %v113 = vand.u32 %v100, 2147483648
      %v114 = vsel %vm112, %v113, %v111
      %v115 = vadd.f32 %v107, 1e-06
      %v116 = vadd.f32 %v114, 1e-06
      %v117 = vrcp.pop %v115
      %v118 = vrcp.pop %v116
      %v119 = vmul.f32 %v91, %v117
      %v120 = vmul.f32 %v92, %v118
      %v121 = vadd.f32 %v119, 0.0
      %v122 = vadd.f32 %v120, 0.0
      %v123 = vpack.c.bf16 %v122, %v121
      %124 = vst [vmem:[#allocation2] sm:$0xff] %v123
      %vm125 = vcmask 7168
      %126 = vst.msk [vmem:[#allocation3] sm:$0xff] %vm125, -inf
      %127 = vst.msk [vmem:[#allocation3 + $0x8] sm:$0xff] %vm125, -inf
      %128 = vst.msk [vmem:[#allocation4] sm:$0xff] %vm125, 0.0
      %129 = vst.msk [vmem:[#allocation4 + $0x8] sm:$0xff] %vm125, 0.0
    $region37: #{transformer_forward.1} parent=1 // pred_fallthru
      _
    %v130 = vld [vmem:[#allocation2] sm:$0xff]
    %v131 = vld [vmem:[#allocation10] sm:$0xff]
    %v132 = vld [vmem:[#allocation10 + $0x8] sm:$0xff]
    %v133 = vld [vmem:[#allocation10 + $0x10] sm:$0xff]
    %v134 = vld [vmem:[#allocation10 + $0x18] sm:$0xff]
    %v135 = vld [vmem:[#allocation10 + $0x20] sm:$0xff]
    %v136 = vld [vmem:[#allocation10 + $0x28] sm:$0xff]
    %v137 = vld [vmem:[#allocation10 + $0x30] sm:$0xff]
    %v138 = vld [vmem:[#allocation10 + $0x38] sm:$0xff]
    %v139 = vld [vmem:[#allocation10 + $0x40] sm:$0xff]
    %v140 = vld [vmem:[#allocation10 + $0x48] sm:$0xff]
    %v141 = vld [vmem:[#allocation10 + $0x50] sm:$0xff]
    %v142 = vld [vmem:[#allocation10 + $0x58] sm:$0xff]
    %v143 = vld [vmem:[#allocation10 + $0x60] sm:$0xff]
    %v144 = vld [vmem:[#allocation10 + $0x68] sm:$0xff]
    %v145 = vld [vmem:[#allocation10 + $0x70] sm:$0xff]
    %v146 = vld [vmem:[#allocation10 + $0x78] sm:$0xff]
    %v147 = vld [vmem:[#allocation11] sm:$0x3]
    %v149 = vlaneseq
    %v150 = vshrl.u32 %v149, 7
    %v151 = vsub.s32 0, %v150
    %v152 = vrot.slane %v147, %v151
    %v153 = vlaneseq
    %v154 = vshrl.u32 %v153, 7
    %v155 = vsub.s32 1, %v154
    %v156 = vrot.slane %v147, %v155
    %v175 = vunpack.c.l.b16 %v131
    %v176 = vunpack.c.h.b16 %v131
    %v177 = vunpack.c.l.b16 %v132
    %v178 = vunpack.c.h.b16 %v132
    %v179 = vunpack.c.l.b16 %v133
    %v180 = vunpack.c.h.b16 %v133
    %v181 = vunpack.c.l.b16 %v134
    %v182 = vunpack.c.h.b16 %v134
    %v183 = vunpack.c.l.b16 %v135
    %v184 = vunpack.c.h.b16 %v135
    %v185 = vunpack.c.l.b16 %v136
    %v186 = vunpack.c.h.b16 %v136
    %v187 = vunpack.c.l.b16 %v137
    %v188 = vunpack.c.h.b16 %v137
    %v189 = vunpack.c.l.b16 %v138
    %v190 = vunpack.c.h.b16 %v138
    %v191 = vunpack.c.l.b16 %v139
    %v192 = vunpack.c.h.b16 %v139
    %v193 = vunpack.c.l.b16 %v140
    %v194 = vunpack.c.h.b16 %v140
    %v195 = vunpack.c.l.b16 %v141
    %v196 = vunpack.c.h.b16 %v141
    %v197 = vunpack.c.l.b16 %v142
    %v198 = vunpack.c.h.b16 %v142
    %v199 = vunpack.c.l.b16 %v143
    %v200 = vunpack.c.h.b16 %v143
    %v201 = vunpack.c.l.b16 %v144
    %v202 = vunpack.c.h.b16 %v144
    %v203 = vunpack.c.l.b16 %v145
    %v204 = vunpack.c.h.b16 %v145
    %v205 = vunpack.c.l.b16 %v146
    %v206 = vunpack.c.h.b16 %v146
    %v207 = vpack.c.b16 %v177, %v175
    %v208 = vpack.c.b16 %v178, %v176
    %v209 = vpack.c.b16 %v181, %v179
    %v210 = vpack.c.b16 %v182, %v180
    %v211 = vpack.c.b16 %v185, %v183
    %v212 = vpack.c.b16 %v186, %v184
    %v213 = vpack.c.b16 %v189, %v187
    %v214 = vpack.c.b16 %v190, %v188
    %v215 = vpack.c.b16 %v193, %v191
    %v216 = vpack.c.b16 %v194, %v192
    %v217 = vpack.c.b16 %v197, %v195
    %v218 = vpack.c.b16 %v198, %v196
    %v219 = vpack.c.b16 %v201, %v199
    %v220 = vpack.c.b16 %v202, %v200
    %v221 = vpack.c.b16 %v205, %v203
    %v222 = vpack.c.b16 %v206, %v204
    %239 = vmatprep.subr.bf16.mxu0 %v208
    %240 = vmatpush1.bf16.msra.mxu0 %v207
    %241 = vmatprep.subr.bf16.mxu0 %v210
    %242 = vmatpush1.bf16.msra.mxu0 %v209
    %243 = vmatprep.subr.bf16.mxu0 %v212
    %244 = vmatpush1.bf16.msra.mxu0 %v211
    %245 = vmatprep.subr.bf16.mxu0 %v214
    %246 = vmatpush1.bf16.msra.mxu0 %v213
    %247 = vmatprep.subr.bf16.mxu0 %v216
    %248 = vmatpush1.bf16.msra.mxu0 %v215
    %249 = vmatprep.subr.bf16.mxu0 %v218
    %250 = vmatpush1.bf16.msra.mxu0 %v217
    %251 = vmatprep.subr.bf16.mxu0 %v220
    %252 = vmatpush1.bf16.msra.mxu0 %v219
    %253 = vmatprep.subr.bf16.mxu0 %v222
    %254 = vmatpush1.bf16.msra.mxu0 %v221
    %255 = vmatprep.subr.bf16.mxu0 0
    %256 = vmatpush1.bf16.msra.mxu0 0
    %257 = vmatprep.subr.bf16.mxu0 0
    %258 = vmatpush1.bf16.msra.mxu0 0
    %259 = vmatprep.subr.bf16.mxu0 0
    %260 = vmatpush1.bf16.msra.mxu0 0
    %261 = vmatprep.subr.bf16.mxu0 0
    %262 = vmatpush1.bf16.msra.mxu0 0
    %263 = vmatprep.subr.bf16.mxu0 0
    %264 = vmatpush1.bf16.msra.mxu0 0
    %265 = vmatprep.subr.bf16.mxu0 0
    %266 = vmatpush1.bf16.msra.mxu0 0
    %267 = vmatprep.subr.bf16.mxu0 0
    %268 = vmatpush1.bf16.msra.mxu0 0
    %269 = vmatprep.subr.bf16.mxu0 0
    %270 = vmatpush1.bf16.msra.mxu0 0
    %271 = vmatprep.mubr.bf16.mxu0 0
    %272 = vmatmul.mubr.bf16.gmra.mrb[0].mxu0 %v130
    %v273 = vpop.f32.mrb[0].mxu0
    %v274 = vadd.f32 %v152, %v273
    %v275 = vpop.f32.mrb[0].mxu0
    %v276 = vadd.f32 %v156, %v275
    %v277 = vpop.f32.mrb[0].mxu0
    %v278 = vadd.f32 %v152, %v277
    %v279 = vpop.f32.mrb[0].mxu0
    %v280 = vadd.f32 %v156, %v279
    %281 = vdwg.mxu0
    %v282 = vld [vmem:[#allocation3] sm:$0xff]
    %v283 = vld [vmem:[#allocation3 + $0x8] sm:$0xff]
    %v284 = vmax.f32 %v274, %v276
    %285 = vmax.xlane.f32.xlu0 %v284
    %v286 = vpop.xlane.xlu0 %285
    %v287 = vmax.f32 %v278, %v280
    %288 = vmax.xlane.f32.xlu0 %v287
    %v289 = vpop.xlane.xlu0 %288
    %v290 = vmax.f32 %v282, %v286
    %v291 = vmax.f32 %v283, %v289
    %v292 = vld [vmem:[#allocation4] sm:$0xff]
    %v293 = vld [vmem:[#allocation4 + $0x8] sm:$0xff]
    %v294 = vsub.f32 %v282, %v290
    %v295 = vsub.f32 %v283, %v291
    %v296 = vmul.f32 %v294, 1.442695
    %v297 = vpow.pop %v296
    %v298 = vmul.f32 %v295, 1.442695
    %v299 = vpow.pop %v298
    %v300 = vmul.f32 %v292, %v297
    %v301 = vmul.f32 %v293, %v299
    %303 = vset.pattern.permute.xlu0 0
    %304 = vperm.xlu0 %303, %v290
    %v305 = vpop.permute.xlu0 %304
    %308 = vset.pattern.permute.xlu0 0
    %309 = vperm.xlu0 %308, %v291
    %v310 = vpop.permute.xlu0 %309
    %v312 = vsub.f32 %v274, %v305
    %v313 = vsub.f32 %v276, %v305
    %v314 = vsub.f32 %v278, %v310
    %v315 = vsub.f32 %v280, %v310
    %v316 = vmul.f32 %v312, 1.442695
    %v317 = vpow.pop %v316
    %v318 = vmul.f32 %v313, 1.442695
    %v319 = vpow.pop %v318
    %v320 = vmul.f32 %v314, 1.442695
    %v321 = vpow.pop %v320
    %v322 = vmul.f32 %v315, 1.442695
    %v323 = vpow.pop %v322
    %v324 = vadd.f32 %v317, %v319
    %325 = vadd.xlane.f32.xlu0 %v324
    %v326 = vpop.xlane.xlu0 %325
    %v327 = vadd.f32 %v321, %v323
    %328 = vadd.xlane.f32.xlu0 %v327
    %v329 = vpop.xlane.xlu0 %328
    %v330 = vadd.f32 %v300, %v326
    %v331 = vadd.f32 %v301, %v329
    %vm332 = vcmask 7168
    %333 = vst.msk [vmem:[#allocation4] sm:$0xff] %vm332, %v330
    %334 = vst.msk [vmem:[#allocation4 + $0x8] sm:$0xff] %vm332, %v331
    %335 = vst.msk [vmem:[#allocation3] sm:$0xff] %vm332, %v290
    %336 = vst.msk [vmem:[#allocation3 + $0x8] sm:$0xff] %vm332, %v291
    %s337 = smul.u32 0, 256
    %s338 = sshra.s32 %s337, 7
    %s339 = sand.u32 %s337, 127
    %s340 = smul.addr %s338, 8
    %s341 = scalar_lea.vmem [#allocation13], %s340
    %342 = vst [vmem:[%s341] sm:$0xff] %v274
    %343 = vst [vmem:[%s341 + $0x8] sm:$0xff] %v276
    %344 = vst [vmem:[%s341 + $0x10] sm:$0xff] %v278
    %345 = vst [vmem:[%s341 + $0x18] sm:$0xff] %v280
    // Predicated region
    $region38: #{transformer_forward.1} parent=1 // pred_check
      %p346 = pneg %p72
    $region39: #{transformer_forward.1} parent=1 // pred_check_branch
      %348 = sbr.rel (%p346) target = $region41
    $region40: #{transformer_forward.1} parent=1 // pred_region
      %v349 = vld [vmem:[#allocation3] sm:$0xff]
      %v350 = vld [vmem:[#allocation3 + $0x8] sm:$0xff]
      %v351 = vld [vmem:[#allocation4] sm:$0xff]
      %v352 = vld [vmem:[#allocation4 + $0x8] sm:$0xff]
      %v353 = vlog2.pop %v351
      %v354 = vmul.f32 %v353, 0.6931472
      %v355 = vlog2.pop %v352
      %v356 = vmul.f32 %v355, 0.6931472
      %v357 = vadd.f32 %v349, %v354
      %v358 = vadd.f32 %v350, %v356
      %v359 = vld [vmem:[#allocation13] sm:$0xff]
      %v360 = vld [vmem:[#allocation13 + $0x8] sm:$0xff]
      %v361 = vld [vmem:[#allocation13 + $0x10] sm:$0xff]
      %v362 = vld [vmem:[#allocation13 + $0x18] sm:$0xff]
      %364 = vset.pattern.permute.xlu0 0
      %365 = vperm.xlu0 %364, %v357
      %v366 = vpop.permute.xlu0 %365
      %369 = vset.pattern.permute.xlu0 0
      %370 = vperm.xlu0 %369, %v358
      %v371 = vpop.permute.xlu0 %370
      %v373 = vsub.f32 %v359, %v366
      %v374 = vsub.f32 %v360, %v366
      %v375 = vsub.f32 %v361, %v371
      %v376 = vsub.f32 %v362, %v371
      %377 = vst [vmem:[#allocation13] sm:$0xff] %v373
      %378 = vst [vmem:[#allocation13 + $0x8] sm:$0xff] %v374
      %379 = vst [vmem:[#allocation13 + $0x10] sm:$0xff] %v375
      %380 = vst [vmem:[#allocation13 + $0x18] sm:$0xff] %v376
    $region41: #{transformer_forward.1} parent=1 // pred_fallthru
      _
    // Predicated region
    $region42: #{transformer_forward.1} parent=1 // pred_check
      _
    $region43: #{transformer_forward.1} parent=1 // pred_check_branch
      %382 = sbr.rel (0) target = $region45
    $region44: #{transformer_forward.1} parent=1 // pred_region
      %s384 = ssub.s32 512, 512
      %385 = vsyncadd [#allocation7], %s384
      %s386 = sshll.u32 [#allocation13], 4
      %s387 = int_to_ptr.vmem [resolvable:$true] %s386
      %392 = dma.vmem_to_hbm [thread:$0]  %s387, 512, %s4, [#allocation7], 256, 256, 16
    $region45: #{transformer_forward.1} parent=1 // pred_fallthru
      _
    // Predicated region
    $region46: #{transformer_forward.1} parent=1 // pred_check
      _
    $region47: #{transformer_forward.1} parent=1 // pred_check_branch
      %394 = sbr.rel (0) target = $region49
    $region48: #{transformer_forward.1} parent=1 // pred_region
      %395 = dma.done [#allocation7], 512
    $region49: #{transformer_forward.1} parent=1 // pred_fallthru
      _
    %396 = vsyncpa [#allocation6], 1
    %397 = vsyncpa [#allocation9], 1
    %398 = vsyncpa [#allocation12], 1
    %399 = vsyncpa [#allocation7], 1

</llo_original>
